<compile_context>
chip_gen: v7x
topology: tpu7x:2x2x1
jax: 0.10.0
libtpu: 0.0.40
codegen_flags: <defaults>
</compile_context>

<pallas_src>
import functools

import jax
import jax.numpy as jnp
from jax.experimental import pallas as pl
from jax.experimental.pallas import tpu as pltpu

_LANE = 128


def _round_up(x, m):
    return ((x + m - 1) // m) * m


def _word_mlp_h_kernel(
    x_ref,
    w0_ref, b0_ref,          # input Linear(in_dim -> hidden)
    w1a_ref, b1a_ref,        # ResLayer 1, first Linear
    w1b_ref, b1b_ref,        # ResLayer 1, second Linear
    w2a_ref, b2a_ref,        # ResLayer 2, first Linear
    w2b_ref, b2b_ref,        # ResLayer 2, second Linear
    o_ref,
):
    cdt = w0_ref.dtype                      # MXU input dtype (bf16 by default)
    x = x_ref[...]                          # already cast in the wrapper

    # Linear(in_dim, hidden); f32 accumulation on the MXU, f32 bias add.
    h = jnp.dot(x, w0_ref[...], preferred_element_type=jnp.float32) + b0_ref[...]

    # ResLayer_CPCFG #1: ReLU(Linear(ReLU(Linear(h)))) + h
    t = jnp.dot(h.astype(cdt), w1a_ref[...],
                preferred_element_type=jnp.float32) + b1a_ref[...]
    t = jnp.maximum(t, 0.0)
    t = jnp.dot(t.astype(cdt), w1b_ref[...],
                preferred_element_type=jnp.float32) + b1b_ref[...]
    t = jnp.maximum(t, 0.0)
    h = t + h

    # ResLayer_CPCFG #2
    t = jnp.dot(h.astype(cdt), w2a_ref[...],
                preferred_element_type=jnp.float32) + b2a_ref[...]
    t = jnp.maximum(t, 0.0)
    t = jnp.dot(t.astype(cdt), w2b_ref[...],
                preferred_element_type=jnp.float32) + b2b_ref[...]
    t = jnp.maximum(t, 0.0)
    h = t + h

    o_ref[...] = h.astype(o_ref.dtype)


@functools.partial(jax.jit, static_argnames=("row_tile", "compute_dtype"))
def word_mlp_h(x, params, row_tile=512, compute_dtype=jnp.bfloat16):
    """x: [..., in_dim] float32.  Returns [..., hidden_dim] in x.dtype."""
    in_dim = x.shape[-1]
    lead_shape = x.shape[:-1]
    hidden = params["w0"].shape[1]

    x2d = x.reshape(-1, in_dim)
    n_rows = x2d.shape[0]

    # ---- row tiling: big tiles for MXU/M occupancy, but shrink for tiny
    # inputs and keep >= 2 grid steps so both v7x TensorCores are used. -----
    row_tile = _round_up(max(row_tile, 8), 8)
    tile = min(row_tile, _round_up(max(n_rows, 1), 8))
    if n_rows >= 16 and pl.cdiv(n_rows, tile) < 2:
        tile = max(8, min(tile, _round_up(pl.cdiv(n_rows, 2), 8)))
    n_pad_rows = _round_up(max(n_rows, 1), tile)
    grid = n_pad_rows // tile

    # ---- pad feature dims to lane width (128) for dense MXU / vst --------
    in_p = _round_up(in_dim, _LANE)
    hid_p = _round_up(hidden, _LANE)

    def pad_w(w, rows, cols):
        w = w.astype(compute_dtype)
        return jnp.pad(w, ((0, rows - w.shape[0]), (0, cols - w.shape[1])))

    def pad_b(b, cols):
        b = b.astype(jnp.float32)
        return jnp.pad(b, ((0, 0), (0, cols - b.shape[1])))

    xp = jnp.pad(x2d.astype(compute_dtype),
                 ((0, n_pad_rows - n_rows), (0, in_p - in_dim)))

    param_arrays = [
        pad_w(params["w0"], in_p, hid_p),  pad_b(params["b0"], hid_p),
        pad_w(params["w1a"], hid_p, hid_p), pad_b(params["b1a"], hid_p),
        pad_w(params["w1b"], hid_p, hid_p), pad_b(params["b1b"], hid_p),
        pad_w(params["w2a"], hid_p, hid_p), pad_b(params["b2a"], hid_p),
        pad_w(params["w2b"], hid_p, hid_p), pad_b(params["b2b"], hid_p),
    ]

    def full_spec(arr):
        # Whole (small) parameter resident in VMEM; same block every step.
        return pl.BlockSpec(arr.shape, lambda i: (0, 0))

    # Advisory cost hint for XLA's scheduler.
    cdt_size = jnp.dtype(compute_dtype).itemsize
    out_size = jnp.dtype(x.dtype).itemsize
    flops = 2 * n_pad_rows * (in_p * hid_p + 4 * hid_p * hid_p)
    bytes_accessed = (
        n_pad_rows * in_p * cdt_size                      # x
        + (in_p * hid_p + 4 * hid_p * hid_p) * cdt_size   # weights
        + 5 * hid_p * 4                                   # biases (f32)
        + n_pad_rows * hid_p * out_size                   # output
    )
    cost = pl.CostEstimate(flops=flops, transcendentals=0,
                           bytes_accessed=bytes_accessed)

    out2d = pl.pallas_call(
        _word_mlp_h_kernel,
        out_shape=jax.ShapeDtypeStruct((n_pad_rows, hid_p), x.dtype),
        grid_spec=pltpu.PrefetchScalarGridSpec(
            num_scalar_prefetch=0,
            grid=(grid,),
            in_specs=[pl.BlockSpec((tile, in_p), lambda i: (i, 0))]
            + [full_spec(a) for a in param_arrays],
            out_specs=pl.BlockSpec((tile, hid_p), lambda i: (i, 0)),
        ),
        compiler_params=pltpu.CompilerParams(
            dimension_semantics=("parallel",),
            vmem_limit_bytes=64 * 1024 * 1024,
        ),
        cost_estimate=cost,
    )(xp, *param_arrays)

    out2d = out2d[:n_rows, :hidden]
    return out2d.reshape(*lead_shape, hidden)


def init_word_mlp_h_params(key, in_dim, hidden_dim, dtype=jnp.float32):
    """Deterministic synthetic parameters.  Weights stored as [in, out]."""
    keys = jax.random.split(key, 10)

    def linear(kw, kb, fan_in, fan_out):
        # torch.nn.Linear default init: U(-1/sqrt(fan_in), 1/sqrt(fan_in))
        bound = 1.0 / jnp.sqrt(fan_in)
        w = jax.random.uniform(kw, (fan_in, fan_out), dtype, -bound, bound)
        b = jax.random.uniform(kb, (1, fan_out), dtype, -bound, bound)
        return w, b

    w0, b0 = linear(keys[0], keys[1], in_dim, hidden_dim)
    w1a, b1a = linear(keys[2], keys[3], hidden_dim, hidden_dim)
    w1b, b1b = linear(keys[4], keys[5], hidden_dim, hidden_dim)
    w2a, b2a = linear(keys[6], keys[7], hidden_dim, hidden_dim)
    w2b, b2b = linear(keys[8], keys[9], hidden_dim, hidden_dim)
    return dict(w0=w0, b0=b0, w1a=w1a, b1a=b1a, w1b=w1b, b1b=b1b,
                w2a=w2a, b2a=b2a, w2b=w2b, b2b=b2b)


def _reference_word_mlp_h(x, p, compute_dtype=jnp.float32):
    """Pure-JAX reference mirroring the PyTorch forward (optionally with the
    same bf16-input / f32-accumulation scheme the kernel uses)."""
    cdt = compute_dtype

    def lin(a, w, b):
        return jnp.dot(a.astype(cdt), w.astype(cdt),
                       preferred_element_type=jnp.float32) + b.astype(jnp.float32)

    h = lin(x, p["w0"], p["b0"])
    t = jnp.maximum(lin(h, p["w1a"], p["b1a"]), 0.0)
    t = jnp.maximum(lin(t, p["w1b"], p["b1b"]), 0.0)
    h = t + h
    t = jnp.maximum(lin(h, p["w2a"], p["b2a"]), 0.0)
    t = jnp.maximum(lin(t, p["w2b"], p["b2b"]), 0.0)
    return t + h


if __name__ == "__main__":
    # Small shapes: batch=2, seq=8 tokens, in_dim=16, hidden=32.
    batch, seq, in_dim, hidden_dim = 2, 8, 16, 32

    key = jax.random.PRNGKey(0)
    kx, kp = jax.random.split(key)
    x = jax.random.normal(kx, (batch, seq, in_dim), dtype=jnp.float32)
    params = init_word_mlp_h_params(kp, in_dim, hidden_dim)

    out = word_mlp_h(x, params)          # defaults: row_tile=512, bf16 compute
    out = jax.block_until_ready(out)
    assert out.shape == (batch, seq, hidden_dim)

    x2d = x.reshape(-1, in_dim)
    ref_matched = _reference_word_mlp_h(
        x2d, params, compute_dtype=jnp.bfloat16).reshape(batch, seq, hidden_dim)
    ref_f32 = _reference_word_mlp_h(
        x2d, params, compute_dtype=jnp.float32).reshape(batch, seq, hidden_dim)

    # Matched-precision check (kernel does exactly bf16 inputs + f32 accum).
    assert jnp.allclose(out, ref_matched, atol=2e-3, rtol=2e-3), \
        "mismatch vs. matched-precision reference"
    # Loose sanity check against the full-f32 PyTorch-equivalent forward.
    assert jnp.allclose(out, ref_f32, atol=5e-2, rtol=5e-2), \
        "mismatch vs. f32 reference"

    print("KERNEL_OK")
</pallas_src>

<mosaic_0001>
module attributes {stable_mosaic.version = 11 : i64} {
  func.func @_word_mlp_h_kernel(%arg0: i32, %arg1: memref<8x128xbf16, #tpu.memory_space<vmem>>, %arg2: memref<128x128xbf16, #tpu.memory_space<vmem>>, %arg3: memref<1x128xf32, #tpu.memory_space<vmem>>, %arg4: memref<128x128xbf16, #tpu.memory_space<vmem>>, %arg5: memref<1x128xf32, #tpu.memory_space<vmem>>, %arg6: memref<128x128xbf16, #tpu.memory_space<vmem>>, %arg7: memref<1x128xf32, #tpu.memory_space<vmem>>, %arg8: memref<128x128xbf16, #tpu.memory_space<vmem>>, %arg9: memref<1x128xf32, #tpu.memory_space<vmem>>, %arg10: memref<128x128xbf16, #tpu.memory_space<vmem>>, %arg11: memref<1x128xf32, #tpu.memory_space<vmem>>, %arg12: memref<8x128xf32, #tpu.memory_space<vmem>>) attributes {dimension_semantics = [#tpu.dimension_semantics<parallel>], iteration_bounds = array<i64: 2>, scalar_prefetch = 0 : i64, scratch_operands = 0 : i64, tpu.core_type = #tpu.core_type<tc>, window_params = [{transform_indices = @transform_0, window_bounds = array<i64: 8, 128>}, {pipeline_mode = #tpu.pipeline_mode<synchronous>, transform_indices = @transform_1, window_bounds = array<i64: 128, 128>}, {pipeline_mode = #tpu.pipeline_mode<synchronous>, transform_indices = @transform_2, window_bounds = array<i64: 1, 128>}, {pipeline_mode = #tpu.pipeline_mode<synchronous>, transform_indices = @transform_3, window_bounds = array<i64: 128, 128>}, {pipeline_mode = #tpu.pipeline_mode<synchronous>, transform_indices = @transform_4, window_bounds = array<i64: 1, 128>}, {pipeline_mode = #tpu.pipeline_mode<synchronous>, transform_indices = @transform_5, window_bounds = array<i64: 128, 128>}, {pipeline_mode = #tpu.pipeline_mode<synchronous>, transform_indices = @transform_6, window_bounds = array<i64: 1, 128>}, {pipeline_mode = #tpu.pipeline_mode<synchronous>, transform_indices = @transform_7, window_bounds = array<i64: 128, 128>}, {pipeline_mode = #tpu.pipeline_mode<synchronous>, transform_indices = @transform_8, window_bounds = array<i64: 1, 128>}, {pipeline_mode = #tpu.pipeline_mode<synchronous>, transform_indices = @transform_9, window_bounds = array<i64: 128, 128>}, {pipeline_mode = #tpu.pipeline_mode<synchronous>, transform_indices = @transform_10, window_bounds = array<i64: 1, 128>}, {transform_indices = @transform_11, window_bounds = array<i64: 8, 128>}]} {
    %c0 = arith.constant 0 : index
    %c0_0 = arith.constant 0 : index
    %0 = vector.load %arg1[%c0, %c0_0] : memref<8x128xbf16, #tpu.memory_space<vmem>>, vector<8x128xbf16>
    %c0_1 = arith.constant 0 : index
    %c0_2 = arith.constant 0 : index
    %1 = vector.load %arg2[%c0_1, %c0_2] : memref<128x128xbf16, #tpu.memory_space<vmem>>, vector<128x128xbf16>
    %cst = arith.constant dense<0.000000e+00> : vector<8x128xf32>
    %2 = tpu.matmul %0, %1, %cst {dimension_numbers = #tpu.dot_dimension_numbers<[1], [0], [0], [1], [0, 0, 1, 1], [], []>} : vector<8x128xbf16>, vector<128x128xbf16>, vector<8x128xf32> -> vector<8x128xf32>
    %c0_3 = arith.constant 0 : index
    %c0_4 = arith.constant 0 : index
    %3 = vector.load %arg3[%c0_3, %c0_4] : memref<1x128xf32, #tpu.memory_space<vmem>>, vector<1x128xf32>
    %4 = vector.broadcast %3 : vector<1x128xf32> to vector<8x128xf32>
    %5 = arith.addf %2, %4 : vector<8x128xf32>
    %6 = arith.truncf %5 : vector<8x128xf32> to vector<8x128xbf16>
    %c0_5 = arith.constant 0 : index
    %c0_6 = arith.constant 0 : index
    %7 = vector.load %arg4[%c0_5, %c0_6] : memref<128x128xbf16, #tpu.memory_space<vmem>>, vector<128x128xbf16>
    %cst_7 = arith.constant dense<0.000000e+00> : vector<8x128xf32>
    %8 = tpu.matmul %6, %7, %cst_7 {dimension_numbers = #tpu.dot_dimension_numbers<[1], [0], [0], [1], [0, 0, 1, 1], [], []>} : vector<8x128xbf16>, vector<128x128xbf16>, vector<8x128xf32> -> vector<8x128xf32>
    %c0_8 = arith.constant 0 : index
    %c0_9 = arith.constant 0 : index
    %9 = vector.load %arg5[%c0_8, %c0_9] : memref<1x128xf32, #tpu.memory_space<vmem>>, vector<1x128xf32>
    %10 = vector.broadcast %9 : vector<1x128xf32> to vector<8x128xf32>
    %11 = arith.addf %8, %10 : vector<8x128xf32>
    %cst_10 = arith.constant 0.000000e+00 : f32
    %12 = vector.broadcast %cst_10 : f32 to vector<8x128xf32>
    %13 = arith.maximumf %11, %12 : vector<8x128xf32>
    %14 = arith.truncf %13 : vector<8x128xf32> to vector<8x128xbf16>
    %c0_11 = arith.constant 0 : index
    %c0_12 = arith.constant 0 : index
    %15 = vector.load %arg6[%c0_11, %c0_12] : memref<128x128xbf16, #tpu.memory_space<vmem>>, vector<128x128xbf16>
    %cst_13 = arith.constant dense<0.000000e+00> : vector<8x128xf32>
    %16 = tpu.matmul %14, %15, %cst_13 {dimension_numbers = #tpu.dot_dimension_numbers<[1], [0], [0], [1], [0, 0, 1, 1], [], []>} : vector<8x128xbf16>, vector<128x128xbf16>, vector<8x128xf32> -> vector<8x128xf32>
    %c0_14 = arith.constant 0 : index
    %c0_15 = arith.constant 0 : index
    %17 = vector.load %arg7[%c0_14, %c0_15] : memref<1x128xf32, #tpu.memory_space<vmem>>, vector<1x128xf32>
    %18 = vector.broadcast %17 : vector<1x128xf32> to vector<8x128xf32>
    %19 = arith.addf %16, %18 : vector<8x128xf32>
    %cst_16 = arith.constant 0.000000e+00 : f32
    %20 = vector.broadcast %cst_16 : f32 to vector<8x128xf32>
    %21 = arith.maximumf %19, %20 : vector<8x128xf32>
    %22 = arith.addf %21, %5 : vector<8x128xf32>
    %23 = arith.truncf %22 : vector<8x128xf32> to vector<8x128xbf16>
    %c0_17 = arith.constant 0 : index
    %c0_18 = arith.constant 0 : index
    %24 = vector.load %arg8[%c0_17, %c0_18] : memref<128x128xbf16, #tpu.memory_space<vmem>>, vector<128x128xbf16>
    %cst_19 = arith.constant dense<0.000000e+00> : vector<8x128xf32>
    %25 = tpu.matmul %23, %24, %cst_19 {dimension_numbers = #tpu.dot_dimension_numbers<[1], [0], [0], [1], [0, 0, 1, 1], [], []>} : vector<8x128xbf16>, vector<128x128xbf16>, vector<8x128xf32> -> vector<8x128xf32>
    %c0_20 = arith.constant 0 : index
    %c0_21 = arith.constant 0 : index
    %26 = vector.load %arg9[%c0_20, %c0_21] : memref<1x128xf32, #tpu.memory_space<vmem>>, vector<1x128xf32>
    %27 = vector.broadcast %26 : vector<1x128xf32> to vector<8x128xf32>
    %28 = arith.addf %25, %27 : vector<8x128xf32>
    %cst_22 = arith.constant 0.000000e+00 : f32
    %29 = vector.broadcast %cst_22 : f32 to vector<8x128xf32>
    %30 = arith.maximumf %28, %29 : vector<8x128xf32>
    %31 = arith.truncf %30 : vector<8x128xf32> to vector<8x128xbf16>
    %c0_23 = arith.constant 0 : index
    %c0_24 = arith.constant 0 : index
    %32 = vector.load %arg10[%c0_23, %c0_24] : memref<128x128xbf16, #tpu.memory_space<vmem>>, vector<128x128xbf16>
    %cst_25 = arith.constant dense<0.000000e+00> : vector<8x128xf32>
    %33 = tpu.matmul %31, %32, %cst_25 {dimension_numbers = #tpu.dot_dimension_numbers<[1], [0], [0], [1], [0, 0, 1, 1], [], []>} : vector<8x128xbf16>, vector<128x128xbf16>, vector<8x128xf32> -> vector<8x128xf32>
    %c0_26 = arith.constant 0 : index
    %c0_27 = arith.constant 0 : index
    %34 = vector.load %arg11[%c0_26, %c0_27] : memref<1x128xf32, #tpu.memory_space<vmem>>, vector<1x128xf32>
    %35 = vector.broadcast %34 : vector<1x128xf32> to vector<8x128xf32>
    %36 = arith.addf %33, %35 : vector<8x128xf32>
    %cst_28 = arith.constant 0.000000e+00 : f32
    %37 = vector.broadcast %cst_28 : f32 to vector<8x128xf32>
    %38 = arith.maximumf %36, %37 : vector<8x128xf32>
    %39 = arith.addf %38, %22 : vector<8x128xf32>
    %c0_29 = arith.constant 0 : index
    %c0_30 = arith.constant 0 : index
    %40 = vector.load %arg12[%c0_29, %c0_30] : memref<8x128xf32, #tpu.memory_space<vmem>>, vector<8x128xf32>
    tpu.vector_store %arg12[%c0_29, %c0_30], %39 {strides = array<i32>} : memref<8x128xf32, #tpu.memory_space<vmem>>, vector<8x128xf32>,
    return
  }
  func.func @transform_0(%arg0: i32) -> (i32, i32) {
    %c0_i32 = arith.constant 0 : i32
    %c0_i32_0 = arith.constant 0 : i32
    return %arg0, %c0_i32 : i32, i32
  }
  func.func @transform_1(%arg0: i32) -> (i32, i32) {
    %c0_i32 = arith.constant 0 : i32
    %c0_i32_0 = arith.constant 0 : i32
    %c0_i32_1 = arith.constant 0 : i32
    return %c0_i32, %c0_i32_0 : i32, i32
  }
  func.func @transform_2(%arg0: i32) -> (i32, i32) {
    %c0_i32 = arith.constant 0 : i32
    %c0_i32_0 = arith.constant 0 : i32
    %c0_i32_1 = arith.constant 0 : i32
    return %c0_i32, %c0_i32_0 : i32, i32
  }
  func.func @transform_3(%arg0: i32) -> (i32, i32) {
    %c0_i32 = arith.constant 0 : i32
    %c0_i32_0 = arith.constant 0 : i32
    %c0_i32_1 = arith.constant 0 : i32
    return %c0_i32, %c0_i32_0 : i32, i32
  }
  func.func @transform_4(%arg0: i32) -> (i32, i32) {
    %c0_i32 = arith.constant 0 : i32
    %c0_i32_0 = arith.constant 0 : i32
    %c0_i32_1 = arith.constant 0 : i32
    return %c0_i32, %c0_i32_0 : i32, i32
  }
  func.func @transform_5(%arg0: i32) -> (i32, i32) {
    %c0_i32 = arith.constant 0 : i32
    %c0_i32_0 = arith.constant 0 : i32
    %c0_i32_1 = arith.constant 0 : i32
    return %c0_i32, %c0_i32_0 : i32, i32
  }
  func.func @transform_6(%arg0: i32) -> (i32, i32) {
    %c0_i32 = arith.constant 0 : i32
    %c0_i32_0 = arith.constant 0 : i32
    %c0_i32_1 = arith.constant 0 : i32
    return %c0_i32, %c0_i32_0 : i32, i32
  }
  func.func @transform_7(%arg0: i32) -> (i32, i32) {
    %c0_i32 = arith.constant 0 : i32
    %c0_i32_0 = arith.constant 0 : i32
    %c0_i32_1 = arith.constant 0 : i32
    return %c0_i32, %c0_i32_0 : i32, i32
  }
  func.func @transform_8(%arg0: i32) -> (i32, i32) {
    %c0_i32 = arith.constant 0 : i32
    %c0_i32_0 = arith.constant 0 : i32
    %c0_i32_1 = arith.constant 0 : i32
    return %c0_i32, %c0_i32_0 : i32, i32
  }
  func.func @transform_9(%arg0: i32) -> (i32, i32) {
    %c0_i32 = arith.constant 0 : i32
    %c0_i32_0 = arith.constant 0 : i32
    %c0_i32_1 = arith.constant 0 : i32
    return %c0_i32, %c0_i32_0 : i32, i32
  }
  func.func @transform_10(%arg0: i32) -> (i32, i32) {
    %c0_i32 = arith.constant 0 : i32
    %c0_i32_0 = arith.constant 0 : i32
    %c0_i32_1 = arith.constant 0 : i32
    return %c0_i32, %c0_i32_0 : i32, i32
  }
  func.func @transform_11(%arg0: i32) -> (i32, i32) {
    %c0_i32 = arith.constant 0 : i32
    %c0_i32_0 = arith.constant 0 : i32
    return %arg0, %c0_i32 : i32, i32
  }
}

</mosaic_0001>

<llo_original>
// kernel: word_mlp_h.1
$region0: #{word_mlp_h.1}
  #allocation0 [shape = 'u32[]', space=smem, size = 0x4, offset = 0x4, fixed_abs, tag = 'smem constant byte address 0x4 - core index']
  #allocation1 [shape = 'u32[144,128]{1,0:T(1,128)}', space=vmem, size = 0x12000, scoped, tag = 'internal scratch']
  %s0 = inlined_call_operand.hbm [shape: bf16[16,128], index: 0, kind: input, shape index: {}]
  %s1 = inlined_call_operand.hbm [shape: bf16[128,128], index: 1, kind: input, shape index: {}]
  %s2 = inlined_call_operand.hbm [shape: f32[1,128], index: 2, kind: input, shape index: {}]
  %s3 = inlined_call_operand.hbm [shape: bf16[128,128], index: 3, kind: input, shape index: {}]
  %s4 = inlined_call_operand.hbm [shape: f32[1,128], index: 4, kind: input, shape index: {}]
  %s5 = inlined_call_operand.hbm [shape: bf16[128,128], index: 5, kind: input, shape index: {}]
  %s6 = inlined_call_operand.hbm [shape: f32[1,128], index: 6, kind: input, shape index: {}]
  %s7 = inlined_call_operand.hbm [shape: bf16[128,128], index: 7, kind: input, shape index: {}]
  %s8 = inlined_call_operand.hbm [shape: f32[1,128], index: 8, kind: input, shape index: {}]
  %s9 = inlined_call_operand.hbm [shape: bf16[128,128], index: 9, kind: input, shape index: {}]
  %s10 = inlined_call_operand.hbm [shape: f32[1,128], index: 10, kind: input, shape index: {}]
  %s11 = inlined_call_operand.hbm [shape: f32[16,128], index: 11, kind: output, shape index: {}]
  %s12 = sld [smem:[#allocation0]]
  $region121: #{word_mlp_h.1} parent=0
    _
  %s14 = ssub.s32 1, %s12
  %s15 = scalar_select 0, %s14, %s12
  $region1: #{word_mlp_h.1} parent=0
    #allocation2 [shape = 'u8[4096]{0}', space=vmem, size = 0x1000, scoped, tag = 'input window, operand 0']
    #allocation3 [shape = 's32[2]{0}', space=sflag, size = 0x8, scoped, tag = 'scoped memory for word_mlp_h.1']
    #allocation4 [shape = 's32[2]{0}', space=sflag, size = 0x8, scoped, tag = 'scoped memory for word_mlp_h.1']
    #allocation5 [shape = 'u8[32768]{0}', space=vmem, size = 0x8000, scoped, tag = 'input window, operand 1, single buffered']
    #allocation6 [shape = 's32[1]{0}', space=sflag, size = 0x4, scoped, tag = 'scoped memory for word_mlp_h.1']
    #allocation7 [shape = 'u8[512]{0}', space=vmem, size = 0x400, scoped, tag = 'input window, operand 2, single buffered']
    #allocation8 [shape = 'u8[32768]{0}', space=vmem, size = 0x8000, scoped, tag = 'input window, operand 3, single buffered']
    #allocation9 [shape = 's32[1]{0}', space=sflag, size = 0x4, scoped, tag = 'scoped memory for word_mlp_h.1']
    #allocation10 [shape = 'u8[512]{0}', space=vmem, size = 0x400, scoped, tag = 'input window, operand 4, single buffered']
    #allocation11 [shape = 'u8[32768]{0}', space=vmem, size = 0x8000, scoped, tag = 'input window, operand 5, single buffered']
    #allocation12 [shape = 's32[1]{0}', space=sflag, size = 0x4, scoped, tag = 'scoped memory for word_mlp_h.1']
    #allocation13 [shape = 'u8[512]{0}', space=vmem, size = 0x400, scoped, tag = 'input window, operand 6, single buffered']
    #allocation14 [shape = 'u8[32768]{0}', space=vmem, size = 0x8000, scoped, tag = 'input window, operand 7, single buffered']
    #allocation15 [shape = 's32[1]{0}', space=sflag, size = 0x4, scoped, tag = 'scoped memory for word_mlp_h.1']
    #allocation16 [shape = 'u8[512]{0}', space=vmem, size = 0x400, scoped, tag = 'input window, operand 8, single buffered']
    #allocation17 [shape = 'u8[32768]{0}', space=vmem, size = 0x8000, scoped, tag = 'input window, operand 9, single buffered']
    #allocation18 [shape = 's32[1]{0}', space=sflag, size = 0x4, scoped, tag = 'scoped memory for word_mlp_h.1']
    #allocation19 [shape = 'u8[512]{0}', space=vmem, size = 0x400, scoped, tag = 'input window, operand 10, single buffered']
    #allocation20 [shape = 'u8[8192]{0}', space=vmem, size = 0x2000, scoped, tag = 'output window, operand 0']
    %16 = vsyncpa [#allocation3], 0
    %s17 = scalar_lea.sflag [#allocation3], 1
    %18 = vsyncpa %s17, 0
    %19 = vsyncpa [#allocation6], 0
    %20 = vsyncpa [#allocation9], 0
    %21 = vsyncpa [#allocation12], 0
    %22 = vsyncpa [#allocation15], 0
    %23 = vsyncpa [#allocation18], 0
    %24 = vsyncpa [#allocation4], 0
    %s25 = scalar_lea.sflag [#allocation4], 1
    %26 = vsyncpa %s25, 0
    loop: start=0, step=1, limit=4
    $region2: #{word_mlp_h.1} parent=1 // loop_pre_header
      _
    $region3: #{word_mlp_h.1} parent=1 // loop_header
      %s28 = sphi 0, %s32
      %p29 = scmp.ge.s32.totalorder %s28, 4
      %s38 = sphi 0, %s40
      %s41 = sphi 0, %s38
      %s42 = sphi 0, %s41
      %s58 = sphi 0, %s42
      %s62 = sphi 0, %s62
      %s64 = sphi 0, %s62
      %s65 = sphi 0, %s64
      %s79 = sphi 0, %s65
      %s83 = sphi 0, %s83
      %s85 = sphi 0, %s83
      %s86 = sphi 0, %s85
      %s100 = sphi 0, %s86
      %s104 = sphi 0, %s104
      %s106 = sphi 0, %s104
      %s107 = sphi 0, %s106
      %s121 = sphi 0, %s107
      %s125 = sphi 0, %s125
      %s127 = sphi 0, %s125
      %s128 = sphi 0, %s127
      %s142 = sphi 0, %s128
      %s146 = sphi 0, %s146
      %s148 = sphi 0, %s146
      %s149 = sphi 0, %s148
      %s163 = sphi 0, %s149
      %s167 = sphi 0, %s167
      %s169 = sphi 0, %s167
      %s170 = sphi 0, %s169
      %s184 = sphi 0, %s170
      %s188 = sphi 0, %s188
      %s190 = sphi 0, %s188
      %s191 = sphi 0, %s190
      %s205 = sphi 0, %s191
      %s209 = sphi 0, %s209
      %s211 = sphi 0, %s209
      %s212 = sphi 0, %s211
      %s226 = sphi 0, %s212
      %s230 = sphi 0, %s230
      %s232 = sphi 0, %s230
      %s233 = sphi 0, %s232
      %s247 = sphi 0, %s233
      %s251 = sphi 0, %s251
      %s253 = sphi 0, %s251
      %s254 = sphi 0, %s253
      %s268 = sphi 0, %s254
      %s274 = sphi 0, %s276
      %s277 = sphi 0, %s274
      %s278 = sphi 0, %s277
      %s294 = sphi 0, %s278
    $region4: #{word_mlp_h.1} parent=1 // loop_header_branch
      %31 = sbr.rel (%p29) target = $region8
    $region5: #{word_mlp_h.1} parent=1 // loop_body
      %s33 = ssub.s32 %s28, 1
      %s34 = ssub.s32 %s28, 2
      %s35 = sadd.s32 %s28, 1
      %s36 = ssub.s32 %s28, %s35
      %p37 = scmp.eq.s32.totalorder %s36, 0
      %s39 = sadd.s32 %s38, 1
      %s40 = scalar_select %p37, %s38, %s39
      %p43 = pneg %p37
      %p44 = scmp.eq.s32.totalorder %s28, 1
      %p45 = por %p43, %p44
      %p46 = scmp.ne.s32.totalorder %s38, %s41
      %p47 = scmp.eq.s32.totalorder %s28, 0
      %p48 = por %p46, %p47
      %p49 = scmp.ne.s32.totalorder %s38, %s41
      %p50 = scmp.eq.s32.totalorder %s33, 1
      %p51 = por %p49, %p50
      %p52 = scmp.ne.s32.totalorder %s41, %s42
      %p53 = scmp.eq.s32.totalorder %s33, 0
      %p54 = por %p52, %p53
      %p55 = scmp.ne.s32.totalorder %s41, %s42
      %p56 = scmp.eq.s32.totalorder %s34, 1
      %p57 = por %p55, %p56
      %p59 = scmp.ne.s32.totalorder %s42, %s58
      %p60 = scmp.eq.s32.totalorder %s34, 0
      %p61 = por %p59, %p60
      %s63 = sadd.s32 %s62, 1
      %p66 = scmp.eq.s32.totalorder %s28, 1
      %p67 = scmp.ne.s32.totalorder %s62, %s64
      %p68 = scmp.eq.s32.totalorder %s28, 0
      %p69 = por %p67, %p68
      %p70 = scmp.ne.s32.totalorder %s62, %s64
      %p71 = scmp.eq.s32.totalorder %s33, 1
      %p72 = por %p70, %p71
      %p73 = scmp.ne.s32.totalorder %s64, %s65
      %p74 = scmp.eq.s32.totalorder %s33, 0
      %p75 = por %p73, %p74
      %p76 = scmp.ne.s32.totalorder %s64, %s65
      %p77 = scmp.eq.s32.totalorder %s34, 1
      %p78 = por %p76, %p77
      %p80 = scmp.ne.s32.totalorder %s65, %s79
      %p81 = scmp.eq.s32.totalorder %s34, 0
      %p82 = por %p80, %p81
      %s84 = sadd.s32 %s83, 1
      %p87 = scmp.eq.s32.totalorder %s28, 1
      %p88 = scmp.ne.s32.totalorder %s83, %s85
      %p89 = scmp.eq.s32.totalorder %s28, 0
      %p90 = por %p88, %p89
      %p91 = scmp.ne.s32.totalorder %s83, %s85
      %p92 = scmp.eq.s32.totalorder %s33, 1
      %p93 = por %p91, %p92
      %p94 = scmp.ne.s32.totalorder %s85, %s86
      %p95 = scmp.eq.s32.totalorder %s33, 0
      %p96 = por %p94, %p95
      %p97 = scmp.ne.s32.totalorder %s85, %s86
      %p98 = scmp.eq.s32.totalorder %s34, 1
      %p99 = por %p97, %p98
      %p101 = scmp.ne.s32.totalorder %s86, %s100
      %p102 = scmp.eq.s32.totalorder %s34, 0
      %p103 = por %p101, %p102
      %s105 = sadd.s32 %s104, 1
      %p108 = scmp.eq.s32.totalorder %s28, 1
      %p109 = scmp.ne.s32.totalorder %s104, %s106
      %p110 = scmp.eq.s32.totalorder %s28, 0
      %p111 = por %p109, %p110
      %p112 = scmp.ne.s32.totalorder %s104, %s106
      %p113 = scmp.eq.s32.totalorder %s33, 1
      %p114 = por %p112, %p113
      %p115 = scmp.ne.s32.totalorder %s106, %s107
      %p116 = scmp.eq.s32.totalorder %s33, 0
      %p117 = por %p115, %p116
      %p118 = scmp.ne.s32.totalorder %s106, %s107
      %p119 = scmp.eq.s32.totalorder %s34, 1
      %p120 = por %p118, %p119
      %p122 = scmp.ne.s32.totalorder %s107, %s121
      %p123 = scmp.eq.s32.totalorder %s34, 0
      %p124 = por %p122, %p123
      %s126 = sadd.s32 %s125, 1
      %p129 = scmp.eq.s32.totalorder %s28, 1
      %p130 = scmp.ne.s32.totalorder %s125, %s127
      %p131 = scmp.eq.s32.totalorder %s28, 0
      %p132 = por %p130, %p131
      %p133 = scmp.ne.s32.totalorder %s125, %s127
      %p134 = scmp.eq.s32.totalorder %s33, 1
      %p135 = por %p133, %p134
      %p136 = scmp.ne.s32.totalorder %s127, %s128
      %p137 = scmp.eq.s32.totalorder %s33, 0
      %p138 = por %p136, %p137
      %p139 = scmp.ne.s32.totalorder %s127, %s128
      %p140 = scmp.eq.s32.totalorder %s34, 1
      %p141 = por %p139, %p140
      %p143 = scmp.ne.s32.totalorder %s128, %s142
      %p144 = scmp.eq.s32.totalorder %s34, 0
      %p145 = por %p143, %p144
      %s147 = sadd.s32 %s146, 1
      %p150 = scmp.eq.s32.totalorder %s28, 1
      %p151 = scmp.ne.s32.totalorder %s146, %s148
      %p152 = scmp.eq.s32.totalorder %s28, 0
      %p153 = por %p151, %p152
      %p154 = scmp.ne.s32.totalorder %s146, %s148
      %p155 = scmp.eq.s32.totalorder %s33, 1
      %p156 = por %p154, %p155
      %p157 = scmp.ne.s32.totalorder %s148, %s149
      %p158 = scmp.eq.s32.totalorder %s33, 0
      %p159 = por %p157, %p158
      %p160 = scmp.ne.s32.totalorder %s148, %s149
      %p161 = scmp.eq.s32.totalorder %s34, 1
      %p162 = por %p160, %p161
      %p164 = scmp.ne.s32.totalorder %s149, %s163
      %p165 = scmp.eq.s32.totalorder %s34, 0
      %p166 = por %p164, %p165
      %s168 = sadd.s32 %s167, 1
      %p171 = scmp.eq.s32.totalorder %s28, 1
      %p172 = scmp.ne.s32.totalorder %s167, %s169
      %p173 = scmp.eq.s32.totalorder %s28, 0
      %p174 = por %p172, %p173
      %p175 = scmp.ne.s32.totalorder %s167, %s169
      %p176 = scmp.eq.s32.totalorder %s33, 1
      %p177 = por %p175, %p176
      %p178 = scmp.ne.s32.totalorder %s169, %s170
      %p179 = scmp.eq.s32.totalorder %s33, 0
      %p180 = por %p178, %p179
      %p181 = scmp.ne.s32.totalorder %s169, %s170
      %p182 = scmp.eq.s32.totalorder %s34, 1
      %p183 = por %p181, %p182
      %p185 = scmp.ne.s32.totalorder %s170, %s184
      %p186 = scmp.eq.s32.totalorder %s34, 0
      %p187 = por %p185, %p186
      %s189 = sadd.s32 %s188, 1
      %p192 = scmp.eq.s32.totalorder %s28, 1
      %p193 = scmp.ne.s32.totalorder %s188, %s190
      %p194 = scmp.eq.s32.totalorder %s28, 0
      %p195 = por %p193, %p194
      %p196 = scmp.ne.s32.totalorder %s188, %s190
      %p197 = scmp.eq.s32.totalorder %s33, 1
      %p198 = por %p196, %p197
      %p199 = scmp.ne.s32.totalorder %s190, %s191
      %p200 = scmp.eq.s32.totalorder %s33, 0
      %p201 = por %p199, %p200
      %p202 = scmp.ne.s32.totalorder %s190, %s191
      %p203 = scmp.eq.s32.totalorder %s34, 1
      %p204 = por %p202, %p203
      %p206 = scmp.ne.s32.totalorder %s191, %s205
      %p207 = scmp.eq.s32.totalorder %s34, 0
      %p208 = por %p206, %p207
      %s210 = sadd.s32 %s209, 1
      %p213 = scmp.eq.s32.totalorder %s28, 1
      %p214 = scmp.ne.s32.totalorder %s209, %s211
      %p215 = scmp.eq.s32.totalorder %s28, 0
      %p216 = por %p214, %p215
      %p217 = scmp.ne.s32.totalorder %s209, %s211
      %p218 = scmp.eq.s32.totalorder %s33, 1
      %p219 = por %p217, %p218
      %p220 = scmp.ne.s32.totalorder %s211, %s212
      %p221 = scmp.eq.s32.totalorder %s33, 0
      %p222 = por %p220, %p221
      %p223 = scmp.ne.s32.totalorder %s211, %s212
      %p224 = scmp.eq.s32.totalorder %s34, 1
      %p225 = por %p223, %p224
      %p227 = scmp.ne.s32.totalorder %s212, %s226
      %p228 = scmp.eq.s32.totalorder %s34, 0
      %p229 = por %p227, %p228
      %s231 = sadd.s32 %s230, 1
      %p234 = scmp.eq.s32.totalorder %s28, 1
      %p235 = scmp.ne.s32.totalorder %s230, %s232
      %p236 = scmp.eq.s32.totalorder %s28, 0
      %p237 = por %p235, %p236
      %p238 = scmp.ne.s32.totalorder %s230, %s232
      %p239 = scmp.eq.s32.totalorder %s33, 1
      %p240 = por %p238, %p239
      %p241 = scmp.ne.s32.totalorder %s232, %s233
      %p242 = scmp.eq.s32.totalorder %s33, 0
      %p243 = por %p241, %p242
      %p244 = scmp.ne.s32.totalorder %s232, %s233
      %p245 = scmp.eq.s32.totalorder %s34, 1
      %p246 = por %p244, %p245
      %p248 = scmp.ne.s32.totalorder %s233, %s247
      %p249 = scmp.eq.s32.totalorder %s34, 0
      %p250 = por %p248, %p249
      %s252 = sadd.s32 %s251, 1
      %p255 = scmp.eq.s32.totalorder %s28, 1
      %p256 = scmp.ne.s32.totalorder %s251, %s253
      %p257 = scmp.eq.s32.totalorder %s28, 0
      %p258 = por %p256, %p257
      %p259 = scmp.ne.s32.totalorder %s251, %s253
      %p260 = scmp.eq.s32.totalorder %s33, 1
      %p261 = por %p259, %p260
      %p262 = scmp.ne.s32.totalorder %s253, %s254
      %p263 = scmp.eq.s32.totalorder %s33, 0
      %p264 = por %p262, %p263
      %p265 = scmp.ne.s32.totalorder %s253, %s254
      %p266 = scmp.eq.s32.totalorder %s34, 1
      %p267 = por %p265, %p266
      %p269 = scmp.ne.s32.totalorder %s254, %s268
      %p270 = scmp.eq.s32.totalorder %s34, 0
      %p271 = por %p269, %p270
      %s272 = ssub.s32 %s28, %s35
      %p273 = scmp.eq.s32.totalorder %s272, 0
      %s275 = sadd.s32 %s274, 1
      %s276 = scalar_select %p273, %s274, %s275
      %p279 = pneg %p273
      %p280 = scmp.eq.s32.totalorder %s28, 1
      %p281 = por %p279, %p280
      %p282 = scmp.ne.s32.totalorder %s274, %s277
      %p283 = scmp.eq.s32.totalorder %s28, 0
      %p284 = por %p282, %p283
      %p285 = scmp.ne.s32.totalorder %s274, %s277
      %p286 = scmp.eq.s32.totalorder %s33, 1
      %p287 = por %p285, %p286
      %p288 = scmp.ne.s32.totalorder %s277, %s278
      %p289 = scmp.eq.s32.totalorder %s33, 0
      %p290 = por %p288, %p289
      %p291 = scmp.ne.s32.totalorder %s277, %s278
      %p292 = scmp.eq.s32.totalorder %s34, 1
      %p293 = por %p291, %p292
      %p295 = scmp.ne.s32.totalorder %s278, %s294
      %p296 = scmp.eq.s32.totalorder %s34, 0
      %p297 = por %p295, %p296
      %p298 = scmp.le.s32.totalorder 1, %s28
      %p299 = scmp.lt.s32.totalorder %s28, 3
      %p300 = pnand %p298, %p299
      %p301 = pneg %p300
      // Predicated region
      $region9: #{word_mlp_h.1} parent=5 // pred_check
        _
      $region10: #{word_mlp_h.1} parent=5 // pred_check_branch
        %303 = sbr.rel (%p300) target = $region12
      $region11: #{word_mlp_h.1} parent=5 // pred_region
        %s304 = ssub.s32 %s28, 1
        // Predicated region
        $region13: #{word_mlp_h.1} parent=11 // pred_check
          %p305 = pneg %p75
        $region14: #{word_mlp_h.1} parent=11 // pred_check_branch
          %307 = sbr.rel (%p305) target = $region16
        $region15: #{word_mlp_h.1} parent=11 // pred_region
          %s309 = ssub.s32 1024, 1024
          %310 = vsyncadd [#allocation6], %s309
          %s311 = sshll.u32 [#allocation5], 4
          %s312 = int_to_ptr.vmem [resolvable:$true] %s311
          %317 = dma.hbm_to_vmem [thread:$0]  %s1, 1024, %s312, [#allocation6], 64, 64, 4
        $region16: #{word_mlp_h.1} parent=11 // pred_fallthru
          _
        // Predicated region
        $region17: #{word_mlp_h.1} parent=11 // pred_check
          %p318 = pneg %p96
        $region18: #{word_mlp_h.1} parent=11 // pred_check_branch
          %320 = sbr.rel (%p318) target = $region20
        $region19: #{word_mlp_h.1} parent=11 // pred_region
          %s322 = ssub.s32 16, 16
          %323 = vsyncadd [#allocation6], %s322
          %s325 = sshll.u32 [#allocation7], 4
          %s326 = int_to_ptr.vmem [resolvable:$true] %s325
          %328 = dma.hbm_to_vmem [thread:$0]  %s2, 16, %s326, [#allocation6]
        $region20: #{word_mlp_h.1} parent=11 // pred_fallthru
          _
        // Predicated region
        $region21: #{word_mlp_h.1} parent=11 // pred_check
          %p329 = pneg %p117
        $region22: #{word_mlp_h.1} parent=11 // pred_check_branch
          %331 = sbr.rel (%p329) target = $region24
        $region23: #{word_mlp_h.1} parent=11 // pred_region
          %s333 = ssub.s32 1024, 1024
          %334 = vsyncadd [#allocation9], %s333
          %s335 = sshll.u32 [#allocation8], 4
          %s336 = int_to_ptr.vmem [resolvable:$true] %s335
          %341 = dma.hbm_to_vmem [thread:$0]  %s3, 1024, %s336, [#allocation9], 64, 64, 4
        $region24: #{word_mlp_h.1} parent=11 // pred_fallthru
          _
        // Predicated region
        $region25: #{word_mlp_h.1} parent=11 // pred_check
          %p342 = pneg %p138
        $region26: #{word_mlp_h.1} parent=11 // pred_check_branch
          %344 = sbr.rel (%p342) target = $region28
        $region27: #{word_mlp_h.1} parent=11 // pred_region
          %s346 = ssub.s32 16, 16
          %347 = vsyncadd [#allocation9], %s346
          %s349 = sshll.u32 [#allocation10], 4
          %s350 = int_to_ptr.vmem [resolvable:$true] %s349
          %352 = dma.hbm_to_vmem [thread:$0]  %s4, 16, %s350, [#allocation9]
        $region28: #{word_mlp_h.1} parent=11 // pred_fallthru
          _
        // Predicated region
        $region29: #{word_mlp_h.1} parent=11 // pred_check
          %p353 = pneg %p159
        $region30: #{word_mlp_h.1} parent=11 // pred_check_branch
          %355 = sbr.rel (%p353) target = $region32
        $region31: #{word_mlp_h.1} parent=11 // pred_region
          %s357 = ssub.s32 1024, 1024
          %358 = vsyncadd [#allocation12], %s357
          %s359 = sshll.u32 [#allocation11], 4
          %s360 = int_to_ptr.vmem [resolvable:$true] %s359
          %365 = dma.hbm_to_vmem [thread:$0]  %s5, 1024, %s360, [#allocation12], 64, 64, 4
        $region32: #{word_mlp_h.1} parent=11 // pred_fallthru
          _
        // Predicated region
        $region33: #{word_mlp_h.1} parent=11 // pred_check
          %p366 = pneg %p180
        $region34: #{word_mlp_h.1} parent=11 // pred_check_branch
          %368 = sbr.rel (%p366) target = $region36
        $region35: #{word_mlp_h.1} parent=11 // pred_region
          %s370 = ssub.s32 16, 16
          %371 = vsyncadd [#allocation12], %s370
          %s373 = sshll.u32 [#allocation13], 4
          %s374 = int_to_ptr.vmem [resolvable:$true] %s373
          %376 = dma.hbm_to_vmem [thread:$0]  %s6, 16, %s374, [#allocation12]
        $region36: #{word_mlp_h.1} parent=11 // pred_fallthru
          _
        // Predicated region
        $region37: #{word_mlp_h.1} parent=11 // pred_check
          %p377 = pneg %p201
        $region38: #{word_mlp_h.1} parent=11 // pred_check_branch
          %379 = sbr.rel (%p377) target = $region40
        $region39: #{word_mlp_h.1} parent=11 // pred_region
          %s381 = ssub.s32 1024, 1024
          %382 = vsyncadd [#allocation15], %s381
          %s383 = sshll.u32 [#allocation14], 4
          %s384 = int_to_ptr.vmem [resolvable:$true] %s383
          %389 = dma.hbm_to_vmem [thread:$0]  %s7, 1024, %s384, [#allocation15], 64, 64, 4
        $region40: #{word_mlp_h.1} parent=11 // pred_fallthru
          _
        // Predicated region
        $region41: #{word_mlp_h.1} parent=11 // pred_check
          %p390 = pneg %p222
        $region42: #{word_mlp_h.1} parent=11 // pred_check_branch
          %392 = sbr.rel (%p390) target = $region44
        $region43: #{word_mlp_h.1} parent=11 // pred_region
          %s394 = ssub.s32 16, 16
          %395 = vsyncadd [#allocation15], %s394
          %s397 = sshll.u32 [#allocation16], 4
          %s398 = int_to_ptr.vmem [resolvable:$true] %s397
          %400 = dma.hbm_to_vmem [thread:$0]  %s8, 16, %s398, [#allocation15]
        $region44: #{word_mlp_h.1} parent=11 // pred_fallthru
          _
        // Predicated region
        $region45: #{word_mlp_h.1} parent=11 // pred_check
          %p401 = pneg %p243
        $region46: #{word_mlp_h.1} parent=11 // pred_check_branch
          %403 = sbr.rel (%p401) target = $region48
        $region47: #{word_mlp_h.1} parent=11 // pred_region
          %s405 = ssub.s32 1024, 1024
          %406 = vsyncadd [#allocation18], %s405
          %s407 = sshll.u32 [#allocation17], 4
          %s408 = int_to_ptr.vmem [resolvable:$true] %s407
          %413 = dma.hbm_to_vmem [thread:$0]  %s9, 1024, %s408, [#allocation18], 64, 64, 4
        $region48: #{word_mlp_h.1} parent=11 // pred_fallthru
          _
        // Predicated region
        $region49: #{word_mlp_h.1} parent=11 // pred_check
          %p414 = pneg %p264
        $region50: #{word_mlp_h.1} parent=11 // pred_check_branch
          %416 = sbr.rel (%p414) target = $region52
        $region51: #{word_mlp_h.1} parent=11 // pred_region
          %s418 = ssub.s32 16, 16
          %419 = vsyncadd [#allocation18], %s418
          %s421 = sshll.u32 [#allocation19], 4
          %s422 = int_to_ptr.vmem [resolvable:$true] %s421
          %424 = dma.hbm_to_vmem [thread:$0]  %s10, 16, %s422, [#allocation18]
        $region52: #{word_mlp_h.1} parent=11 // pred_fallthru
          _
      $region12: #{word_mlp_h.1} parent=5 // pred_fallthru
        _
      %p425 = scmp.lt.s32.totalorder %s28, 2
      // Predicated region
      $region53: #{word_mlp_h.1} parent=5 // pred_check
        %p426 = pneg %p425
      $region54: #{word_mlp_h.1} parent=5 // pred_check_branch
        %428 = sbr.rel (%p426) target = $region56
      $region55: #{word_mlp_h.1} parent=5 // pred_region
        // Predicated region
        $region57: #{word_mlp_h.1} parent=55 // pred_check
          %p429 = pneg %p48
        $region58: #{word_mlp_h.1} parent=55 // pred_check_branch
          %431 = sbr.rel (%p429) target = $region60
        $region59: #{word_mlp_h.1} parent=55 // pred_region
          %s432 = sand.u32 %s38, 1
          %s433 = scalar_lea.sflag [#allocation3], %s432
          %s434 = sand.u32 %s38, 1
          %s435 = smul.addr %s434, 4
          %s436 = scalar_lea.vmem [#allocation2], %s435
          %s438 = ssub.s32 64, 64
          %439 = vsyncadd %s433, %s438
          %s440 = smul.addr %s28, 64
          %s441 = scalar_lea.hbm %s0, %s440
          %s443 = sshll.u32 %s436, 4
          %s444 = int_to_ptr.vmem [resolvable:$true] %s443
          %446 = dma.hbm_to_vmem [thread:$0]  %s441, 64, %s444, %s433
        $region60: #{word_mlp_h.1} parent=55 // pred_fallthru
          _
      $region56: #{word_mlp_h.1} parent=5 // pred_fallthru
        _
      %p447 = scmp.le.s32.totalorder 1, %s28
      %p448 = scmp.lt.s32.totalorder %s28, 3
      %p449 = pnand %p447, %p448
      %p450 = pneg %p449
      // Predicated region
      $region61: #{word_mlp_h.1} parent=5 // pred_check
        _
      $region62: #{word_mlp_h.1} parent=5 // pred_check_branch
        %452 = sbr.rel (%p449) target = $region64
      $region63: #{word_mlp_h.1} parent=5 // pred_region
        %s453 = ssub.s32 %s28, 1
        %s454 = sand.u32 %s41, 1
        %s455 = scalar_lea.sflag [#allocation3], %s454
        %s456 = sand.u32 %s41, 1
        %s457 = smul.addr %s456, 4
        %s458 = scalar_lea.vmem [#allocation2], %s457
        // Predicated region
        $region65: #{word_mlp_h.1} parent=63 // pred_check
          %p459 = pneg %p54
        $region66: #{word_mlp_h.1} parent=63 // pred_check_branch
          %461 = sbr.rel (%p459) target = $region68
        $region67: #{word_mlp_h.1} parent=63 // pred_region
          %462 = dma.done %s455, 64
        $region68: #{word_mlp_h.1} parent=63 // pred_fallthru
          _
        // Predicated region
        $region69: #{word_mlp_h.1} parent=63 // pred_check
          %p463 = pneg %p75
        $region70: #{word_mlp_h.1} parent=63 // pred_check_branch
          %465 = sbr.rel (%p463) target = $region72
        $region71: #{word_mlp_h.1} parent=63 // pred_region
          %466 = dma.done [#allocation6], 1024
        $region72: #{word_mlp_h.1} parent=63 // pred_fallthru
          _
        // Predicated region
        $region73: #{word_mlp_h.1} parent=63 // pred_check
          %p467 = pneg %p96
        $region74: #{word_mlp_h.1} parent=63 // pred_check_branch
          %469 = sbr.rel (%p467) target = $region76
        $region75: #{word_mlp_h.1} parent=63 // pred_region
          %470 = dma.done [#allocation6], 16
        $region76: #{word_mlp_h.1} parent=63 // pred_fallthru
          _
        // Predicated region
        $region77: #{word_mlp_h.1} parent=63 // pred_check
          %p471 = pneg %p117
        $region78: #{word_mlp_h.1} parent=63 // pred_check_branch
          %473 = sbr.rel (%p471) target = $region80
        $region79: #{word_mlp_h.1} parent=63 // pred_region
          %474 = dma.done [#allocation9], 1024
        $region80: #{word_mlp_h.1} parent=63 // pred_fallthru
          _
        // Predicated region
        $region81: #{word_mlp_h.1} parent=63 // pred_check
          %p475 = pneg %p138
        $region82: #{word_mlp_h.1} parent=63 // pred_check_branch
          %477 = sbr.rel (%p475) target = $region84
        $region83: #{word_mlp_h.1} parent=63 // pred_region
          %478 = dma.done [#allocation9], 16
        $region84: #{word_mlp_h.1} parent=63 // pred_fallthru
          _
        // Predicated region
        $region85: #{word_mlp_h.1} parent=63 // pred_check
          %p479 = pneg %p159
        $region86: #{word_mlp_h.1} parent=63 // pred_check_branch
          %481 = sbr.rel (%p479) target = $region88
        $region87: #{word_mlp_h.1} parent=63 // pred_region
          %482 = dma.done [#allocation12], 1024
        $region88: #{word_mlp_h.1} parent=63 // pred_fallthru
          _
        // Predicated region
        $region89: #{word_mlp_h.1} parent=63 // pred_check
          %p483 = pneg %p180
        $region90: #{word_mlp_h.1} parent=63 // pred_check_branch
          %485 = sbr.rel (%p483) target = $region92
        $region91: #{word_mlp_h.1} parent=63 // pred_region
          %486 = dma.done [#allocation12], 16
        $region92: #{word_mlp_h.1} parent=63 // pred_fallthru
          _
        // Predicated region
        $region93: #{word_mlp_h.1} parent=63 // pred_check
          %p487 = pneg %p201
        $region94: #{word_mlp_h.1} parent=63 // pred_check_branch
          %489 = sbr.rel (%p487) target = $region96
        $region95: #{word_mlp_h.1} parent=63 // pred_region
          %490 = dma.done [#allocation15], 1024
        $region96: #{word_mlp_h.1} parent=63 // pred_fallthru
          _
        // Predicated region
        $region97: #{word_mlp_h.1} parent=63 // pred_check
          %p491 = pneg %p222
        $region98: #{word_mlp_h.1} parent=63 // pred_check_branch
          %493 = sbr.rel (%p491) target = $region100
        $region99: #{word_mlp_h.1} parent=63 // pred_region
          %494 = dma.done [#allocation15], 16
        $region100: #{word_mlp_h.1} parent=63 // pred_fallthru
          _
        // Predicated region
        $region101: #{word_mlp_h.1} parent=63 // pred_check
          %p495 = pneg %p243
        $region102: #{word_mlp_h.1} parent=63 // pred_check_branch
          %497 = sbr.rel (%p495) target = $region104
        $region103: #{word_mlp_h.1} parent=63 // pred_region
          %498 = dma.done [#allocation18], 1024
        $region104: #{word_mlp_h.1} parent=63 // pred_fallthru
          _
        // Predicated region
        $region105: #{word_mlp_h.1} parent=63 // pred_check
          %p499 = pneg %p264
        $region106: #{word_mlp_h.1} parent=63 // pred_check_branch
          %501 = sbr.rel (%p499) target = $region108
        $region107: #{word_mlp_h.1} parent=63 // pred_region
          %502 = dma.done [#allocation18], 16
        $region108: #{word_mlp_h.1} parent=63 // pred_fallthru
          _
        %s503 = sand.u32 %s41, 1
        %s504 = scalar_lea.sflag [#allocation3], %s503
        %s505 = sand.u32 %s41, 1
        %s506 = smul.addr %s505, 4
        %s507 = scalar_lea.vmem [#allocation2], %s506
        %p508 = pneg %p54
        %p509 = pneg %p51
        %p510 = pneg %p75
        %p511 = pneg %p72
        %p512 = pneg %p96
        %p513 = pneg %p93
        %p514 = pneg %p117
        %p515 = pneg %p114
        %p516 = pneg %p138
        %p517 = pneg %p135
        %p518 = pneg %p159
        %p519 = pneg %p156
        %p520 = pneg %p180
        %p521 = pneg %p177
        %p522 = pneg %p201
        %p523 = pneg %p198
        %p524 = pneg %p222
        %p525 = pneg %p219
        %p526 = pneg %p243
        %p527 = pneg %p240
        %p528 = pneg %p264
        %p529 = pneg %p261
        %p530 = pneg %p290
        %p531 = pneg %p287
        %s532 = sand.u32 %s277, 1
        %s533 = scalar_lea.sflag [#allocation4], %s532
        %s534 = sand.u32 %s277, 1
        %s535 = smul.addr %s534, 8
        %s536 = scalar_lea.vmem [#allocation20], %s535
        %v538 = vld [vmem:[%s458] sm:$0xf]
        %v539 = vld [vmem:[#allocation5] sm:$0xf]
        %v540 = vld [vmem:[#allocation5 + $0x4] sm:$0xf]
        %v541 = vld [vmem:[#allocation5 + $0x8] sm:$0xf]
        %v542 = vld [vmem:[#allocation5 + $0xc] sm:$0xf]
        %v543 = vld [vmem:[#allocation5 + $0x10] sm:$0xf]
        %v544 = vld [vmem:[#allocation5 + $0x14] sm:$0xf]
        %v545 = vld [vmem:[#allocation5 + $0x18] sm:$0xf]
        %v546 = vld [vmem:[#allocation5 + $0x1c] sm:$0xf]
        %v547 = vld [vmem:[#allocation5 + $0x20] sm:$0xf]
        %v548 = vld [vmem:[#allocation5 + $0x24] sm:$0xf]
        %v549 = vld [vmem:[#allocation5 + $0x28] sm:$0xf]
        %v550 = vld [vmem:[#allocation5 + $0x2c] sm:$0xf]
        %v551 = vld [vmem:[#allocation5 + $0x30] sm:$0xf]
        %v552 = vld [vmem:[#allocation5 + $0x34] sm:$0xf]
        %v553 = vld [vmem:[#allocation5 + $0x38] sm:$0xf]
        %v554 = vld [vmem:[#allocation5 + $0x3c] sm:$0xf]
        %v555 = vld [vmem:[#allocation7] sm:$0x1]
        %v557 = vlaneseq
        %v558 = vshrl.u32 %v557, 7
        %v559 = vsub.s32 0, %v558
        %v560 = vrot.slane %v555, %v559
        %v578 = vunpack.c.l.b16 %v539
        %v579 = vunpack.c.l.b16 %v540
        %v580 = vunpack.c.l.b16 %v541
        %v581 = vunpack.c.l.b16 %v542
        %v582 = vunpack.c.l.b16 %v543
        %v583 = vunpack.c.l.b16 %v544
        %v584 = vunpack.c.l.b16 %v545
        %v585 = vunpack.c.l.b16 %v546
        %v586 = vunpack.c.l.b16 %v547
        %v587 = vunpack.c.l.b16 %v548
        %v588 = vunpack.c.l.b16 %v549
        %v589 = vunpack.c.l.b16 %v550
        %v590 = vunpack.c.l.b16 %v551
        %v591 = vunpack.c.l.b16 %v552
        %v592 = vunpack.c.l.b16 %v553
        %v593 = vunpack.c.l.b16 %v554
        %v594 = vpack.c.b16 %v579, %v578
        %v595 = vpack.c.b16 %v581, %v580
        %v596 = vpack.c.b16 %v583, %v582
        %v597 = vpack.c.b16 %v585, %v584
        %v598 = vpack.c.b16 %v587, %v586
        %v599 = vpack.c.b16 %v589, %v588
        %v600 = vpack.c.b16 %v591, %v590
        %v601 = vpack.c.b16 %v593, %v592
        %610 = vmatprep.subr.bf16.mxu0 0
        %611 = vmatpush1.bf16.msra.mxu0 %v594
        %612 = vmatprep.subr.bf16.mxu0 0
        %613 = vmatpush1.bf16.msra.mxu0 %v595
        %614 = vmatprep.subr.bf16.mxu0 0
        %615 = vmatpush1.bf16.msra.mxu0 %v596
        %616 = vmatprep.subr.bf16.mxu0 0
        %617 = vmatpush1.bf16.msra.mxu0 %v597
        %618 = vmatprep.subr.bf16.mxu0 0
        %619 = vmatpush1.bf16.msra.mxu0 %v598
        %620 = vmatprep.subr.bf16.mxu0 0
        %621 = vmatpush1.bf16.msra.mxu0 %v599
        %622 = vmatprep.subr.bf16.mxu0 0
        %623 = vmatpush1.bf16.msra.mxu0 %v600
        %624 = vmatprep.subr.bf16.mxu0 0
        %625 = vmatpush1.bf16.msra.mxu0 %v601
        %626 = vmatprep.subr.bf16.mxu0 0
        %627 = vmatpush1.bf16.msra.mxu0 0
        %628 = vmatprep.subr.bf16.mxu0 0
        %629 = vmatpush1.bf16.msra.mxu0 0
        %630 = vmatprep.subr.bf16.mxu0 0
        %631 = vmatpush1.bf16.msra.mxu0 0
        %632 = vmatprep.subr.bf16.mxu0 0
        %633 = vmatpush1.bf16.msra.mxu0 0
        %634 = vmatprep.subr.bf16.mxu0 0
        %635 = vmatpush1.bf16.msra.mxu0 0
        %636 = vmatprep.subr.bf16.mxu0 0
        %637 = vmatpush1.bf16.msra.mxu0 0
        %638 = vmatprep.subr.bf16.mxu0 0
        %639 = vmatpush1.bf16.msra.mxu0 0
        %640 = vmatprep.subr.bf16.mxu0 0
        %641 = vmatpush1.bf16.msra.mxu0 0
        %642 = vmatprep.mubr.bf16.mxu0 0
        %643 = vmatmul.mubr.bf16.gmra.mrb[0].mxu0 %v538
        %v644 = vpop.f32.mrb[0].mxu0
        %v645 = vadd.f32 %v560, %v644
        %v646 = vpop.f32.mrb[0].mxu0
        %v647 = vpop.f32.mrb[0].mxu0
        %v648 = vpop.f32.mrb[0].mxu0
        %649 = vdwg.mxu0
        %v650 = vpack.c.bf16 %v645, %v645
        %v651 = vld [vmem:[#allocation8] sm:$0xf]
        %v652 = vld [vmem:[#allocation8 + $0x4] sm:$0xf]
        %v653 = vld [vmem:[#allocation8 + $0x8] sm:$0xf]
        %v654 = vld [vmem:[#allocation8 + $0xc] sm:$0xf]
        %v655 = vld [vmem:[#allocation8 + $0x10] sm:$0xf]
        %v656 = vld [vmem:[#allocation8 + $0x14] sm:$0xf]
        %v657 = vld [vmem:[#allocation8 + $0x18] sm:$0xf]
        %v658 = vld [vmem:[#allocation8 + $0x1c] sm:$0xf]
        %v659 = vld [vmem:[#allocation8 + $0x20] sm:$0xf]
        %v660 = vld [vmem:[#allocation8 + $0x24] sm:$0xf]
        %v661 = vld [vmem:[#allocation8 + $0x28] sm:$0xf]
        %v662 = vld [vmem:[#allocation8 + $0x2c] sm:$0xf]
        %v663 = vld [vmem:[#allocation8 + $0x30] sm:$0xf]
        %v664 = vld [vmem:[#allocation8 + $0x34] sm:$0xf]
        %v665 = vld [vmem:[#allocation8 + $0x38] sm:$0xf]
        %v666 = vld [vmem:[#allocation8 + $0x3c] sm:$0xf]
        %v667 = vld [vmem:[#allocation10] sm:$0x1]
        %v669 = vlaneseq
        %v670 = vshrl.u32 %v669, 7
        %v671 = vsub.s32 0, %v670
        %v672 = vrot.slane %v667, %v671
        %v690 = vunpack.c.l.b16 %v651
        %v691 = vunpack.c.l.b16 %v652
        %v692 = vunpack.c.l.b16 %v653
        %v693 = vunpack.c.l.b16 %v654
        %v694 = vunpack.c.l.b16 %v655
        %v695 = vunpack.c.l.b16 %v656
        %v696 = vunpack.c.l.b16 %v657
        %v697 = vunpack.c.l.b16 %v658
        %v698 = vunpack.c.l.b16 %v659
        %v699 = vunpack.c.l.b16 %v660
        %v700 = vunpack.c.l.b16 %v661
        %v701 = vunpack.c.l.b16 %v662
        %v702 = vunpack.c.l.b16 %v663
        %v703 = vunpack.c.l.b16 %v664
        %v704 = vunpack.c.l.b16 %v665
        %v705 = vunpack.c.l.b16 %v666
        %v706 = vpack.c.b16 %v691, %v690
        %v707 = vpack.c.b16 %v693, %v692
        %v708 = vpack.c.b16 %v695, %v694
        %v709 = vpack.c.b16 %v697, %v696
        %v710 = vpack.c.b16 %v699, %v698
        %v711 = vpack.c.b16 %v701, %v700
        %v712 = vpack.c.b16 %v703, %v702
        %v713 = vpack.c.b16 %v705, %v704
        %722 = vmatprep.subr.bf16.mxu0 0
        %723 = vmatpush1.bf16.msra.mxu0 %v706
        %724 = vmatprep.subr.bf16.mxu0 0
        %725 = vmatpush1.bf16.msra.mxu0 %v707
        %726 = vmatprep.subr.bf16.mxu0 0
        %727 = vmatpush1.bf16.msra.mxu0 %v708
        %728 = vmatprep.subr.bf16.mxu0 0
        %729 = vmatpush1.bf16.msra.mxu0 %v709
        %730 = vmatprep.subr.bf16.mxu0 0
        %731 = vmatpush1.bf16.msra.mxu0 %v710
        %732 = vmatprep.subr.bf16.mxu0 0
        %733 = vmatpush1.bf16.msra.mxu0 %v711
        %734 = vmatprep.subr.bf16.mxu0 0
        %735 = vmatpush1.bf16.msra.mxu0 %v712
        %736 = vmatprep.subr.bf16.mxu0 0
        %737 = vmatpush1.bf16.msra.mxu0 %v713
        %738 = vmatprep.subr.bf16.mxu0 0
        %739 = vmatpush1.bf16.msra.mxu0 0
        %740 = vmatprep.subr.bf16.mxu0 0
        %741 = vmatpush1.bf16.msra.mxu0 0
        %742 = vmatprep.subr.bf16.mxu0 0
        %743 = vmatpush1.bf16.msra.mxu0 0
        %744 = vmatprep.subr.bf16.mxu0 0
        %745 = vmatpush1.bf16.msra.mxu0 0
        %746 = vmatprep.subr.bf16.mxu0 0
        %747 = vmatpush1.bf16.msra.mxu0 0
        %748 = vmatprep.subr.bf16.mxu0 0
        %749 = vmatpush1.bf16.msra.mxu0 0
        %750 = vmatprep.subr.bf16.mxu0 0
        %751 = vmatpush1.bf16.msra.mxu0 0
        %752 = vmatprep.subr.bf16.mxu0 0
        %753 = vmatpush1.bf16.msra.mxu0 0
        %754 = vmatprep.mubr.bf16.mxu0 0
        %755 = vmatmul.mubr.bf16.gmra.mrb[0].mxu0 %v650
        %v756 = vpop.f32.mrb[0].mxu0
        %v757 = vadd.f32 %v672, %v756
        %v758 = vpop.f32.mrb[0].mxu0
        %v759 = vpop.f32.mrb[0].mxu0
        %v760 = vpop.f32.mrb[0].mxu0
        %761 = vdwg.mxu0
        %v762 = vmax.f32 %v757, 0.0
        %v763 = vpack.c.bf16 %v762, %v762
        %v764 = vld [vmem:[#allocation11] sm:$0xf]
        %v765 = vld [vmem:[#allocation11 + $0x4] sm:$0xf]
        %v766 = vld [vmem:[#allocation11 + $0x8] sm:$0xf]
        %v767 = vld [vmem:[#allocation11 + $0xc] sm:$0xf]
        %v768 = vld [vmem:[#allocation11 + $0x10] sm:$0xf]
        %v769 = vld [vmem:[#allocation11 + $0x14] sm:$0xf]
        %v770 = vld [vmem:[#allocation11 + $0x18] sm:$0xf]
        %v771 = vld [vmem:[#allocation11 + $0x1c] sm:$0xf]
        %v772 = vld [vmem:[#allocation11 + $0x20] sm:$0xf]
        %v773 = vld [vmem:[#allocation11 + $0x24] sm:$0xf]
        %v774 = vld [vmem:[#allocation11 + $0x28] sm:$0xf]
        %v775 = vld [vmem:[#allocation11 + $0x2c] sm:$0xf]
        %v776 = vld [vmem:[#allocation11 + $0x30] sm:$0xf]
        %v777 = vld [vmem:[#allocation11 + $0x34] sm:$0xf]
        %v778 = vld [vmem:[#allocation11 + $0x38] sm:$0xf]
        %v779 = vld [vmem:[#allocation11 + $0x3c] sm:$0xf]
        %v780 = vld [vmem:[#allocation13] sm:$0x1]
        %v782 = vlaneseq
        %v783 = vshrl.u32 %v782, 7
        %v784 = vsub.s32 0, %v783
        %v785 = vrot.slane %v780, %v784
        %v803 = vunpack.c.l.b16 %v764
        %v804 = vunpack.c.l.b16 %v765
        %v805 = vunpack.c.l.b16 %v766
        %v806 = vunpack.c.l.b16 %v767
        %v807 = vunpack.c.l.b16 %v768
        %v808 = vunpack.c.l.b16 %v769
        %v809 = vunpack.c.l.b16 %v770
        %v810 = vunpack.c.l.b16 %v771
        %v811 = vunpack.c.l.b16 %v772
        %v812 = vunpack.c.l.b16 %v773
        %v813 = vunpack.c.l.b16 %v774
        %v814 = vunpack.c.l.b16 %v775
        %v815 = vunpack.c.l.b16 %v776
        %v816 = vunpack.c.l.b16 %v777
        %v817 = vunpack.c.l.b16 %v778
        %v818 = vunpack.c.l.b16 %v779
        %v819 = vpack.c.b16 %v804, %v803
        %v820 = vpack.c.b16 %v806, %v805
        %v821 = vpack.c.b16 %v808, %v807
        %v822 = vpack.c.b16 %v810, %v809
        %v823 = vpack.c.b16 %v812, %v811
        %v824 = vpack.c.b16 %v814, %v813
        %v825 = vpack.c.b16 %v816, %v815
        %v826 = vpack.c.b16 %v818, %v817
        %835 = vmatprep.subr.bf16.mxu0 0
        %836 = vmatpush1.bf16.msra.mxu0 %v819
        %837 = vmatprep.subr.bf16.mxu0 0
        %838 = vmatpush1.bf16.msra.mxu0 %v820
        %839 = vmatprep.subr.bf16.mxu0 0
        %840 = vmatpush1.bf16.msra.mxu0 %v821
        %841 = vmatprep.subr.bf16.mxu0 0
        %842 = vmatpush1.bf16.msra.mxu0 %v822
        %843 = vmatprep.subr.bf16.mxu0 0
        %844 = vmatpush1.bf16.msra.mxu0 %v823
        %845 = vmatprep.subr.bf16.mxu0 0
        %846 = vmatpush1.bf16.msra.mxu0 %v824
        %847 = vmatprep.subr.bf16.mxu0 0
        %848 = vmatpush1.bf16.msra.mxu0 %v825
        %849 = vmatprep.subr.bf16.mxu0 0
        %850 = vmatpush1.bf16.msra.mxu0 %v826
        %851 = vmatprep.subr.bf16.mxu0 0
        %852 = vmatpush1.bf16.msra.mxu0 0
        %853 = vmatprep.subr.bf16.mxu0 0
        %854 = vmatpush1.bf16.msra.mxu0 0
        %855 = vmatprep.subr.bf16.mxu0 0
        %856 = vmatpush1.bf16.msra.mxu0 0
        %857 = vmatprep.subr.bf16.mxu0 0
        %858 = vmatpush1.bf16.msra.mxu0 0
        %859 = vmatprep.subr.bf16.mxu0 0
        %860 = vmatpush1.bf16.msra.mxu0 0
        %861 = vmatprep.subr.bf16.mxu0 0
        %862 = vmatpush1.bf16.msra.mxu0 0
        %863 = vmatprep.subr.bf16.mxu0 0
        %864 = vmatpush1.bf16.msra.mxu0 0
        %865 = vmatprep.subr.bf16.mxu0 0
        %866 = vmatpush1.bf16.msra.mxu0 0
        %867 = vmatprep.mubr.bf16.mxu0 0
        %868 = vmatmul.mubr.bf16.gmra.mrb[0].mxu0 %v763
        %v869 = vpop.f32.mrb[0].mxu0
        %v870 = vadd.f32 %v785, %v869
        %v871 = vpop.f32.mrb[0].mxu0
        %v872 = vpop.f32.mrb[0].mxu0
        %v873 = vpop.f32.mrb[0].mxu0
        %874 = vdwg.mxu0
        %v875 = vmax.f32 %v870, 0.0
        %v876 = vadd.f32 %v875, %v645
        %v877 = vpack.c.bf16 %v876, %v876
        %v878 = vld [vmem:[#allocation14] sm:$0xf]
        %v879 = vld [vmem:[#allocation14 + $0x4] sm:$0xf]
        %v880 = vld [vmem:[#allocation14 + $0x8] sm:$0xf]
        %v881 = vld [vmem:[#allocation14 + $0xc] sm:$0xf]
        %v882 = vld [vmem:[#allocation14 + $0x10] sm:$0xf]
        %v883 = vld [vmem:[#allocation14 + $0x14] sm:$0xf]
        %v884 = vld [vmem:[#allocation14 + $0x18] sm:$0xf]
        %v885 = vld [vmem:[#allocation14 + $0x1c] sm:$0xf]
        %v886 = vld [vmem:[#allocation14 + $0x20] sm:$0xf]
        %v887 = vld [vmem:[#allocation14 + $0x24] sm:$0xf]
        %v888 = vld [vmem:[#allocation14 + $0x28] sm:$0xf]
        %v889 = vld [vmem:[#allocation14 + $0x2c] sm:$0xf]
        %v890 = vld [vmem:[#allocation14 + $0x30] sm:$0xf]
        %v891 = vld [vmem:[#allocation14 + $0x34] sm:$0xf]
        %v892 = vld [vmem:[#allocation14 + $0x38] sm:$0xf]
        %v893 = vld [vmem:[#allocation14 + $0x3c] sm:$0xf]
        %v894 = vld [vmem:[#allocation16] sm:$0x1]
        %v896 = vlaneseq
        %v897 = vshrl.u32 %v896, 7
        %v898 = vsub.s32 0, %v897
        %v899 = vrot.slane %v894, %v898
        %v917 = vunpack.c.l.b16 %v878
        %v918 = vunpack.c.l.b16 %v879
        %v919 = vunpack.c.l.b16 %v880
        %v920 = vunpack.c.l.b16 %v881
        %v921 = vunpack.c.l.b16 %v882
        %v922 = vunpack.c.l.b16 %v883
        %v923 = vunpack.c.l.b16 %v884
        %v924 = vunpack.c.l.b16 %v885
        %v925 = vunpack.c.l.b16 %v886
        %v926 = vunpack.c.l.b16 %v887
        %v927 = vunpack.c.l.b16 %v888
        %v928 = vunpack.c.l.b16 %v889
        %v929 = vunpack.c.l.b16 %v890
        %v930 = vunpack.c.l.b16 %v891
        %v931 = vunpack.c.l.b16 %v892
        %v932 = vunpack.c.l.b16 %v893
        %v933 = vpack.c.b16 %v918, %v917
        %v934 = vpack.c.b16 %v920, %v919
        %v935 = vpack.c.b16 %v922, %v921
        %v936 = vpack.c.b16 %v924, %v923
        %v937 = vpack.c.b16 %v926, %v925
        %v938 = vpack.c.b16 %v928, %v927
        %v939 = vpack.c.b16 %v930, %v929
        %v940 = vpack.c.b16 %v932, %v931
        %949 = vmatprep.subr.bf16.mxu0 0
        %950 = vmatpush1.bf16.msra.mxu0 %v933
        %951 = vmatprep.subr.bf16.mxu0 0
        %952 = vmatpush1.bf16.msra.mxu0 %v934
        %953 = vmatprep.subr.bf16.mxu0 0
        %954 = vmatpush1.bf16.msra.mxu0 %v935
        %955 = vmatprep.subr.bf16.mxu0 0
        %956 = vmatpush1.bf16.msra.mxu0 %v936
        %957 = vmatprep.subr.bf16.mxu0 0
        %958 = vmatpush1.bf16.msra.mxu0 %v937
        %959 = vmatprep.subr.bf16.mxu0 0
        %960 = vmatpush1.bf16.msra.mxu0 %v938
        %961 = vmatprep.subr.bf16.mxu0 0
        %962 = vmatpush1.bf16.msra.mxu0 %v939
        %963 = vmatprep.subr.bf16.mxu0 0
        %964 = vmatpush1.bf16.msra.mxu0 %v940
        %965 = vmatprep.subr.bf16.mxu0 0
        %966 = vmatpush1.bf16.msra.mxu0 0
        %967 = vmatprep.subr.bf16.mxu0 0
        %968 = vmatpush1.bf16.msra.mxu0 0
        %969 = vmatprep.subr.bf16.mxu0 0
        %970 = vmatpush1.bf16.msra.mxu0 0
        %971 = vmatprep.subr.bf16.mxu0 0
        %972 = vmatpush1.bf16.msra.mxu0 0
        %973 = vmatprep.subr.bf16.mxu0 0
        %974 = vmatpush1.bf16.msra.mxu0 0
        %975 = vmatprep.subr.bf16.mxu0 0
        %976 = vmatpush1.bf16.msra.mxu0 0
        %977 = vmatprep.subr.bf16.mxu0 0
        %978 = vmatpush1.bf16.msra.mxu0 0
        %979 = vmatprep.subr.bf16.mxu0 0
        %980 = vmatpush1.bf16.msra.mxu0 0
        %981 = vmatprep.mubr.bf16.mxu0 0
        %982 = vmatmul.mubr.bf16.gmra.mrb[0].mxu0 %v877
        %v983 = vpop.f32.mrb[0].mxu0
        %v984 = vadd.f32 %v899, %v983
        %v985 = vpop.f32.mrb[0].mxu0
        %v986 = vpop.f32.mrb[0].mxu0
        %v987 = vpop.f32.mrb[0].mxu0
        %988 = vdwg.mxu0
        %v989 = vmax.f32 %v984, 0.0
        %v990 = vpack.c.bf16 %v989, %v989
        %v991 = vld [vmem:[#allocation17] sm:$0xf]
        %v992 = vld [vmem:[#allocation17 + $0x4] sm:$0xf]
        %v993 = vld [vmem:[#allocation17 + $0x8] sm:$0xf]
        %v994 = vld [vmem:[#allocation17 + $0xc] sm:$0xf]
        %v995 = vld [vmem:[#allocation17 + $0x10] sm:$0xf]
        %v996 = vld [vmem:[#allocation17 + $0x14] sm:$0xf]
        %v997 = vld [vmem:[#allocation17 + $0x18] sm:$0xf]
        %v998 = vld [vmem:[#allocation17 + $0x1c] sm:$0xf]
        %v999 = vld [vmem:[#allocation17 + $0x20] sm:$0xf]
        %v1000 = vld [vmem:[#allocation17 + $0x24] sm:$0xf]
        %v1001 = vld [vmem:[#allocation17 + $0x28] sm:$0xf]
        %v1002 = vld [vmem:[#allocation17 + $0x2c] sm:$0xf]
        %v1003 = vld [vmem:[#allocation17 + $0x30] sm:$0xf]
        %v1004 = vld [vmem:[#allocation17 + $0x34] sm:$0xf]
        %v1005 = vld [vmem:[#allocation17 + $0x38] sm:$0xf]
        %v1006 = vld [vmem:[#allocation17 + $0x3c] sm:$0xf]
        %v1007 = vld [vmem:[#allocation19] sm:$0x1]
        %v1009 = vlaneseq
        %v1010 = vshrl.u32 %v1009, 7
        %v1011 = vsub.s32 0, %v1010
        %v1012 = vrot.slane %v1007, %v1011
        %v1030 = vunpack.c.l.b16 %v991
        %v1031 = vunpack.c.l.b16 %v992
        %v1032 = vunpack.c.l.b16 %v993
        %v1033 = vunpack.c.l.b16 %v994
        %v1034 = vunpack.c.l.b16 %v995
        %v1035 = vunpack.c.l.b16 %v996
        %v1036 = vunpack.c.l.b16 %v997
        %v1037 = vunpack.c.l.b16 %v998
        %v1038 = vunpack.c.l.b16 %v999
        %v1039 = vunpack.c.l.b16 %v1000
        %v1040 = vunpack.c.l.b16 %v1001
        %v1041 = vunpack.c.l.b16 %v1002
        %v1042 = vunpack.c.l.b16 %v1003
        %v1043 = vunpack.c.l.b16 %v1004
        %v1044 = vunpack.c.l.b16 %v1005
        %v1045 = vunpack.c.l.b16 %v1006
        %v1046 = vpack.c.b16 %v1031, %v1030
        %v1047 = vpack.c.b16 %v1033, %v1032
        %v1048 = vpack.c.b16 %v1035, %v1034
        %v1049 = vpack.c.b16 %v1037, %v1036
        %v1050 = vpack.c.b16 %v1039, %v1038
        %v1051 = vpack.c.b16 %v1041, %v1040
        %v1052 = vpack.c.b16 %v1043, %v1042
        %v1053 = vpack.c.b16 %v1045, %v1044
        %1062 = vmatprep.subr.bf16.mxu0 0
        %1063 = vmatpush1.bf16.msra.mxu0 %v1046
        %1064 = vmatprep.subr.bf16.mxu0 0
        %1065 = vmatpush1.bf16.msra.mxu0 %v1047
        %1066 = vmatprep.subr.bf16.mxu0 0
        %1067 = vmatpush1.bf16.msra.mxu0 %v1048
        %1068 = vmatprep.subr.bf16.mxu0 0
        %1069 = vmatpush1.bf16.msra.mxu0 %v1049
        %1070 = vmatprep.subr.bf16.mxu0 0
        %1071 = vmatpush1.bf16.msra.mxu0 %v1050
        %1072 = vmatprep.subr.bf16.mxu0 0
        %1073 = vmatpush1.bf16.msra.mxu0 %v1051
        %1074 = vmatprep.subr.bf16.mxu0 0
        %1075 = vmatpush1.bf16.msra.mxu0 %v1052
        %1076 = vmatprep.subr.bf16.mxu0 0
        %1077 = vmatpush1.bf16.msra.mxu0 %v1053
        %1078 = vmatprep.subr.bf16.mxu0 0
        %1079 = vmatpush1.bf16.msra.mxu0 0
        %1080 = vmatprep.subr.bf16.mxu0 0
        %1081 = vmatpush1.bf16.msra.mxu0 0
        %1082 = vmatprep.subr.bf16.mxu0 0
        %1083 = vmatpush1.bf16.msra.mxu0 0
        %1084 = vmatprep.subr.bf16.mxu0 0
        %1085 = vmatpush1.bf16.msra.mxu0 0
        %1086 = vmatprep.subr.bf16.mxu0 0
        %1087 = vmatpush1.bf16.msra.mxu0 0
        %1088 = vmatprep.subr.bf16.mxu0 0
        %1089 = vmatpush1.bf16.msra.mxu0 0
        %1090 = vmatprep.subr.bf16.mxu0 0
        %1091 = vmatpush1.bf16.msra.mxu0 0
        %1092 = vmatprep.subr.bf16.mxu0 0
        %1093 = vmatpush1.bf16.msra.mxu0 0
        %1094 = vmatprep.mubr.bf16.mxu0 0
        %1095 = vmatmul.mubr.bf16.gmra.mrb[0].mxu0 %v990
        %v1096 = vpop.f32.mrb[0].mxu0
        %v1097 = vadd.f32 %v1012, %v1096
        %v1098 = vpop.f32.mrb[0].mxu0
        %v1099 = vpop.f32.mrb[0].mxu0
        %v1100 = vpop.f32.mrb[0].mxu0
        %1101 = vdwg.mxu0
        %v1102 = vmax.f32 %v1097, 0.0
        %v1103 = vadd.f32 %v1102, %v876
        %1104 = vst [vmem:[%s536] sm:$0xff] %v1103
        %s1105 = sand.u32 %s277, 1
        %s1106 = scalar_lea.sflag [#allocation4], %s1105
        %s1107 = sand.u32 %s277, 1
        %s1108 = smul.addr %s1107, 8
        %s1109 = scalar_lea.vmem [#allocation20], %s1108
        // Predicated region
        $region109: #{word_mlp_h.1} parent=63 // pred_check
          %p1110 = pneg %p287
        $region110: #{word_mlp_h.1} parent=63 // pred_check_branch
          %1112 = sbr.rel (%p1110) target = $region112
        $region111: #{word_mlp_h.1} parent=63 // pred_region
          %s1114 = ssub.s32 128, 128
          %1115 = vsyncadd %s1106, %s1114
          %s1116 = smul.addr %s33, 128
          %s1117 = scalar_lea.hbm %s11, %s1116
          %s1119 = sshll.u32 %s1109, 4
          %s1120 = int_to_ptr.vmem [resolvable:$true] %s1119
          %1122 = dma.vmem_to_hbm [thread:$0]  %s1120, 128, %s1117, %s1106
        $region112: #{word_mlp_h.1} parent=63 // pred_fallthru
          _
      $region64: #{word_mlp_h.1} parent=5 // pred_fallthru
        _
      %p1123 = scmp.le.s32.totalorder 2, %s28
      // Predicated region
      $region113: #{word_mlp_h.1} parent=5 // pred_check
        %p1124 = pneg %p1123
      $region114: #{word_mlp_h.1} parent=5 // pred_check_branch
        %1126 = sbr.rel (%p1124) target = $region116
      $region115: #{word_mlp_h.1} parent=5 // pred_region
        %s1127 = ssub.s32 %s28, 2
        // Predicated region
        $region117: #{word_mlp_h.1} parent=115 // pred_check
          %p1128 = pneg %p293
        $region118: #{word_mlp_h.1} parent=115 // pred_check_branch
          %1130 = sbr.rel (%p1128) target = $region120
        $region119: #{word_mlp_h.1} parent=115 // pred_region
          %s1131 = sand.u32 %s278, 1
          %s1132 = scalar_lea.sflag [#allocation4], %s1131
          %s1133 = sand.u32 %s278, 1
          %s1134 = smul.addr %s1133, 8
          %s1135 = scalar_lea.vmem [#allocation20], %s1134
          %1136 = dma.done %s1132, 128
        $region120: #{word_mlp_h.1} parent=115 // pred_fallthru
          _
      $region116: #{word_mlp_h.1} parent=5 // pred_fallthru
        _
    $region6: #{word_mlp_h.1} parent=1 // loop_footer
      %s32 = sadd.s32 1, %s28
    $region7: #{word_mlp_h.1} parent=1 // loop_footer_branch
      %27 = sbr.rel target = $region3
    $region8: #{word_mlp_h.1} parent=1 // loop_exit
      _
    %1137 = vsyncpa [#allocation3], 1
    %s1138 = scalar_lea.sflag [#allocation3], 1
    %1139 = vsyncpa %s1138, 1
    %1140 = vsyncpa [#allocation6], 1
    %1141 = vsyncpa [#allocation9], 1
    %1142 = vsyncpa [#allocation12], 1
    %1143 = vsyncpa [#allocation15], 1
    %1144 = vsyncpa [#allocation18], 1
    %1145 = vsyncpa [#allocation4], 1
    %s1146 = scalar_lea.sflag [#allocation4], 1
    %1147 = vsyncpa %s1146, 1

</llo_original>
